<compile_context>
chip_gen: v7x
topology: tpu7x:2x2x1
jax: 0.10.0
libtpu: 0.0.40
codegen_flags: <defaults>
</compile_context>

<pallas_src>
import functools

import numpy as np
import jax
import jax.numpy as jnp
from jax.experimental import pallas as pl
from jax.experimental.pallas import tpu as pltpu


def _dma_flatten_kernel(x_hbm, o_hbm, copy_sem, *, tb, rem):
    """One grid step: HBM->HBM DMA of a contiguous row slab (no VMEM staging)."""
    i = pl.program_id(0)
    start = i * tb

    def copy_rows(nrows):
        cp = pltpu.make_async_copy(
            x_hbm.at[pl.ds(start, nrows)],
            o_hbm.at[pl.ds(start, nrows)],
            copy_sem,
        )
        cp.start()
        cp.wait()

    if rem == 0:
        copy_rows(tb)
    else:
        last = pl.num_programs(0) - 1

        @pl.when(i != last)
        def _():
            copy_rows(tb)

        @pl.when(i == last)
        def _():
            copy_rows(rem)


def flatten_extractor(observations: jax.Array) -> jax.Array:
    """Pallas equivalent of FlattenExtractor.forward.

    observations: (B, *obs_shape) -> (B, prod(obs_shape)), same dtype.
    Call under jax.jit so the wrapper reshape stays metadata-only.
    """
    B = observations.shape[0]
    feat = int(np.prod(observations.shape[1:])) if observations.ndim > 1 else 1

    # Row-major flatten of a contiguous array: metadata-only under jit.
    x2d = observations.reshape(B, feat)

    itemsize = jnp.dtype(observations.dtype).itemsize
    row_bytes = max(feat * itemsize, 1)

    # Native sublane packing per dtype: 8 rows (f32), 16 (bf16), 32 (int8/fp8).
    sub = max(8, 32 // itemsize)

    # Each grid step is one HBM->HBM DMA; no VMEM is used, so block size only
    # trades per-step overhead against having enough steps to shard across
    # TensorCores.  ~8 MiB per DMA keeps step overhead negligible on all of
    # v5e / v6e / v7x.
    target_block_bytes = 8 * 1024 * 1024
    tb = max(sub, (target_block_bytes // row_bytes) // sub * sub)

    # Guarantee >= 2 grid steps when the batch allows it, so
    # dimension_semantics=("parallel",) can split the copy over both v7x TCs.
    if B >= 2 * sub and pl.cdiv(B, tb) < 2:
        half = pl.cdiv(B, 2)
        tb = max(sub, pl.cdiv(half, sub) * sub)

    tb = min(tb, B)
    nb = pl.cdiv(B, tb)
    rem = B % tb

    kernel = functools.partial(_dma_flatten_kernel, tb=tb, rem=rem)

    return pl.pallas_call(
        kernel,
        out_shape=jax.ShapeDtypeStruct((B, feat), observations.dtype),
        grid_spec=pltpu.PrefetchScalarGridSpec(
            num_scalar_prefetch=0,
            grid=(nb,),
            # Raw HBM refs on both sides: the kernel drives the DMA engine
            # directly, no auto HBM<->VMEM pipelining.
            in_specs=[pl.BlockSpec(memory_space=pl.ANY)],
            out_specs=pl.BlockSpec(memory_space=pl.ANY),
            scratch_shapes=[pltpu.SemaphoreType.DMA(())],
        ),
        compiler_params=pltpu.CompilerParams(
            dimension_semantics=("parallel",),
        ),
    )(x2d)


if __name__ == "__main__":
    key = jax.random.PRNGKey(0)
    # observation_space.shape == (4, 16, 16) -> features_dim = 1024
    B, C, H, W = 2, 4, 16, 16
    x = jax.random.normal(key, (B, C, H, W), dtype=jnp.float32)

    # Reference: plain row-major reshape == torch.flatten(start_dim=1).
    ref = x.reshape(B, C * H * W)

    # jit so the wrapper reshape is metadata-only (free) before the kernel.
    out = jax.jit(flatten_extractor)(x)
    out = jax.block_until_ready(out)

    assert out.shape == (B, C * H * W), out.shape
    assert out.dtype == x.dtype
    assert jnp.array_equal(out, ref), "flatten mismatch"

    print("KERNEL_OK")
</pallas_src>

<mosaic_0001>
module attributes {stable_mosaic.version = 11 : i64} {
  func.func @_dma_flatten_kernel(%arg0: i32, %arg1: memref<2x1024xf32, #tpu.memory_space<any>>, %arg2: memref<2x1024xf32, #tpu.memory_space<any>>, %arg3: memref<!tpu.dma_semaphore, #tpu.memory_space<semaphore_mem>>) attributes {dimension_semantics = [#tpu.dimension_semantics<parallel>], iteration_bounds = array<i64: 1>, scalar_prefetch = 0 : i64, scratch_operands = 1 : i64, tpu.core_type = #tpu.core_type<tc>, window_params = [{}, {}]} {
    %c2_i32 = arith.constant 2 : i32
    %0 = arith.muli %arg0, %c2_i32 : i32
    %c0_i32 = arith.constant 0 : i32
    %1 = tpu.memref_slice %arg1[%0, %c0_i32] : memref<2x1024xf32, #tpu.memory_space<any>> -> memref<2x1024xf32, #tpu.memory_space<any>>
    %c0_i32_0 = arith.constant 0 : i32
    %2 = tpu.memref_slice %arg2[%0, %c0_i32_0] : memref<2x1024xf32, #tpu.memory_space<any>> -> memref<2x1024xf32, #tpu.memory_space<any>>
    tpu.enqueue_dma source(%1 : memref<2x1024xf32, #tpu.memory_space<any>>) target(%2 : memref<2x1024xf32, #tpu.memory_space<any>>) target_semaphore(%arg3 : memref<!tpu.dma_semaphore, #tpu.memory_space<semaphore_mem>>)
    %c0_i32_1 = arith.constant 0 : i32
    %3 = tpu.memref_slice %arg1[%0, %c0_i32_1] : memref<2x1024xf32, #tpu.memory_space<any>> -> memref<2x1024xf32, #tpu.memory_space<any>>
    %c0_i32_2 = arith.constant 0 : i32
    %4 = tpu.memref_slice %arg2[%0, %c0_i32_2] : memref<2x1024xf32, #tpu.memory_space<any>> -> memref<2x1024xf32, #tpu.memory_space<any>>
    tpu.wait_dma2 semaphore(%arg3 : memref<!tpu.dma_semaphore, #tpu.memory_space<semaphore_mem>>) src(%3 : memref<2x1024xf32, #tpu.memory_space<any>>) dst(%4 : memref<2x1024xf32, #tpu.memory_space<any>>)
    return
  }
}

</mosaic_0001>

<llo_original>
// kernel: flatten_extractor.1
$region0: #{flatten_extractor.1}
  #allocation0 [shape = 'u32[]', space=smem, size = 0x4, offset = 0x4, fixed_abs, tag = 'smem constant byte address 0x4 - core index']
  #allocation1 [shape = 'u32[144,128]{1,0:T(1,128)}', space=vmem, size = 0x12000, scoped, tag = 'internal scratch']
  #allocation2 [shape = 's32[1]{0}', space=sflag, size = 0x4, scoped, tag = 'scratch operand']
  #allocation3 [shape = 's32[]', space=sflag, size = 0x4, offset = 0, fixed_abs, tag = 'sflag constant byte address 0x0 - dummy sync flag']
  #allocation4 [shape = 's32[]', space=sflag, size = 0x4, offset = 0, fixed_abs, tag = 'sflag constant byte address 0x0 - dummy sync flag']
  #allocation5 [shape = 'u32[]', space=smem, size = 0x4, offset = 0x44, fixed_abs, tag = 'smem constant byte address 0x44 - assertion arg 0']
  #allocation6 [shape = 'u32[]', space=smem, size = 0x4, offset = 0x48, fixed_abs, tag = 'smem constant byte address 0x48 - assertion arg 1']
  %s0 = inlined_call_operand.vmem [shape: f32[2,1024], index: 0, kind: input, shape index: {}]
  %s1 = inlined_call_operand.hbm [shape: f32[2,1024], index: 1, kind: output, shape index: {}]
  %s2 = sld [smem:[#allocation0]]
  $region6: #{flatten_extractor.1} parent=0
    _
  %s4 = ssub.s32 1, %s2
  %s5 = scalar_select 0, %s4, %s2
  %s6 = smul.u32 0, 2
  %s7 = sshra.s32 %s6, 1
  %s8 = sand.u32 %s6, 1
  %s9 = smul.u32 %s7, 8
  %s10 = smul.addr %s9, 2
  %s11 = scalar_lea.vmem %s0, %s10
  %s12 = smul.addr %s9, 32
  %s13 = scalar_lea.hbm %s1, %s12
  // Predicated region
  $region2: #{flatten_extractor.1} parent=0 // pred_check
    _
  $region3: #{flatten_extractor.1} parent=0 // pred_check_branch
    %15 = sbr.rel target = $region5
  $region4: #{flatten_extractor.1} parent=0 // pred_region
    %16 = sst [smem:[#allocation5]] [#allocation4]
    %17 = sst [smem:[#allocation6]] [#allocation3]
  $region5: #{flatten_extractor.1} parent=0 // pred_fallthru
    _
  %19 = shalt.err (0)
  %s21 = sshll.u32 %s11, 4
  %s22 = int_to_ptr.vmem [resolvable:$true] %s21
  %24 = dma.vmem_to_hbm [thread:$0]  %s22, 256, %s13, [#allocation2]
  %s25 = smul.u32 2, 1
  %s26 = smul.u32 %s25, 8
  %s27 = sshll.u32 %s26, 4
  %28 = dma.done [#allocation2], %s27
  %29 = vsyncmov [#allocation2]
  %s30 = vpop.sfrf %29
  %p31 = scmp.eq.s32.totalorder %s30, 0
  %p32 = pneg %p31
  %34 = shalt.err (%p32)

</llo_original>
